<compile_context>
chip_gen: v5e
topology: v5e:2x2
jax: 0.10.0
libtpu: 0.0.40
codegen_flags: <defaults>
</compile_context>

<pallas_src>
import functools

import jax
import jax.numpy as jnp
from jax.experimental import pallas as pl
from jax.experimental.pallas import tpu as pltpu

BN_EPS = 1e-5


def _round_up(v, mult):
    return (v + mult - 1) // mult * mult


def _pick_time_block(t_len, max_tb=8):
    """Largest time-block TB <= max_tb dividing T, preferring a grid >= 2
    (pipelining / v7x megacore for the x-projection kernel)."""
    cands = [d for d in range(1, min(max_tb, t_len) + 1) if t_len % d == 0]
    multi = [d for d in cands if t_len // d >= 2]
    return max(multi) if multi else max(cands)


# ------------------------------ Pallas kernels ------------------------------

def _build_edge_masks(width, lanes, kw):
    """f32 lane masks for the shifted-slab conv, built ONCE per kernel body.

    Lane layout is a concatenation of complete width-rows of length `width`,
    so a single `lane % width` iota covers every timestep/batch/height row.
    """
    if kw == 1:
        return None
    col = jax.lax.broadcasted_iota(jnp.int32, (1, lanes), 1) % width
    pad = kw // 2
    masks = []
    for dw in range(kw):
        d = dw - pad
        if d == 0:
            masks.append(None)
        elif d > 0:
            masks.append((col < (width - d)).astype(jnp.float32))
        else:
            masks.append((col >= (-d)).astype(jnp.float32))
    return masks


def _shifted_slab(a, masks, *, kw):
    """im2col slab for a (1, kw) width-convolution.

    a: (C, L) channels-on-sublanes activation, L lanes = complete width rows.
    Returns (kw*C, L) where rows [dw*C:(dw+1)*C] hold `a` shifted by
    (dw - kw//2) along the width axis (zeroed outside each width row), so one
    matmul against the tap-concatenated weight implements the convolution.
    Shifts use pltpu.roll (XLU slot) + a precomputed f32 edge mask.
    """
    if kw == 1:
        return a
    _, lanes = a.shape
    pad = kw // 2
    parts = []
    for dw in range(kw):
        d = dw - pad
        if d == 0:
            parts.append(a)
        else:
            shifted = pltpu.roll(a, shift=(-d) % lanes, axis=1)  # [:, i] = a[:, i+d]
            parts.append(shifted * masks[dw])
    return jnp.concatenate(parts, axis=0)


def _xproj_kernel(x_ref, wx_ref, xc_ref, *, kw, width, gate_precision):
    """Non-recurrent x-path projection of [update; out] gates for TB timesteps.

    x_ref : (1, Ci, TB*M)    TB input frames, timesteps flattened on lanes
    wx_ref: (2*Ch, kw*Ci)    x-path weights of both gates, taps along K
    xc_ref: (1, 2*Ch, TB*M)  x contribution of both gates
    Grid over time blocks is "parallel" (independent blocks; both TCs on v7x).
    """
    x = x_ref[0].astype(jnp.float32)                       # (Ci, TB*M)
    masks = _build_edge_masks(width, x.shape[1], kw)       # built once
    slab = _shifted_slab(x, masks, kw=kw)                  # (kw*Ci, TB*M)
    xc_ref[0] = jnp.dot(wx_ref[...], slab,
                        preferred_element_type=jnp.float32,
                        precision=gate_precision)


def _recurrent_kernel(xc_ref, wuh_ref, woh_ref, out_ref, h_ref, *,
                      kw, width, t_block, m, gate_precision):
    """One grid step == TB timesteps of one ConvGRUCell layer (h-path only).

    xc_ref : (1, 2*Ch, TB*M)  precomputed x contributions ([update; out])
    wuh_ref: (Ch, kw*Ch)      h-path update-gate weights, taps along K
    woh_ref: (Ch, kw*Ch)      h-path out-gate weights, taps along K
    out_ref: (1, Ch, TB*M)    hidden states for the TB timesteps
    h_ref  : (Ch, M) f32      persistent hidden state (VMEM scratch)
    """
    @pl.when(pl.program_id(0) == 0)
    def _():  # prev_state=None -> zeros
        h_ref[...] = jnp.zeros_like(h_ref)

    ch = h_ref.shape[0]
    inv_m = 1.0 / m
    masks = _build_edge_masks(width, m, kw)      # hoisted: once per grid step
    ones_col = jnp.ones((m, 1), jnp.float32)     # BN stat reduction operand
    wuh = wuh_ref[...]
    woh = woh_ref[...]
    xc = xc_ref[0]                               # (2*Ch, TB*M) f32

    def bn(y):
        # One-pass training-mode BatchNorm2d (identity affine) with the
        # sum / sum-of-squares reduction on the MXU instead of the XLU.
        # The tiny (2Ch, M) x (M, 1) dot uses HIGHEST so stats stay f32.
        stacked = jnp.concatenate([y, y * y], axis=0)            # (2*Ch, M)
        sums = jnp.dot(stacked, ones_col,
                       preferred_element_type=jnp.float32,
                       precision=jax.lax.Precision.HIGHEST)       # (2*Ch, 1)
        mean = sums[:ch] * inv_m
        var = jnp.maximum(sums[ch:] * inv_m - mean * mean, 0.0)
        return (y - mean) * jax.lax.rsqrt(var + BN_EPS)

    dot = functools.partial(jnp.dot, preferred_element_type=jnp.float32,
                            precision=gate_precision)

    h = h_ref[...]                               # (Ch, M), carried across t
    for tb in range(t_block):                    # fully unrolled recurrence
        lo = tb * m
        xcu = xc[:ch, lo:lo + m]                 # x part of update gate
        xco = xc[ch:, lo:lo + m]                 # x part of out gate

        # Update gate.  (Source quirk: the "reset" path reuses the update
        # gate's conv + an identical fresh BN, so reset == update.)
        slab_h = _shifted_slab(h, masks, kw=kw)
        update = jax.nn.sigmoid(bn(xcu + dot(wuh, slab_h)))
        reset = update

        # Out gate on [x, h * reset] (x part already in xco).
        slab_hr = _shifted_slab(h * reset, masks, kw=kw)
        out_in = jnp.tanh(bn(xco + dot(woh, slab_hr)))

        h = h * (1.0 - update) + out_in * update
        out_ref[0, :, lo:lo + m] = h.astype(out_ref.dtype)   # lane-aligned store
    h_ref[...] = h                               # carried to next grid step


def conv_x_projection(x_seq, wx, *, kw, width, gate_precision):
    """x-path gate projection for the whole sequence: grid parallel over
    time blocks.  x_seq: (T//TB, Ci, TB*M) -> (T//TB, 2*Ch, TB*M)."""
    n_blk, ci, lanes = x_seq.shape
    co2 = wx.shape[0]
    kernel = functools.partial(_xproj_kernel, kw=kw, width=width,
                               gate_precision=gate_precision)
    grid_spec = pltpu.PrefetchScalarGridSpec(
        num_scalar_prefetch=0,
        grid=(n_blk,),
        in_specs=[
            pl.BlockSpec((1, ci, lanes), lambda t: (t, 0, 0)),
            pl.BlockSpec(wx.shape, lambda t: (0, 0)),     # resident weights
        ],
        out_specs=pl.BlockSpec((1, co2, lanes), lambda t: (t, 0, 0)),
    )
    return pl.pallas_call(
        kernel,
        out_shape=jax.ShapeDtypeStruct((n_blk, co2, lanes), jnp.float32),
        grid_spec=grid_spec,
        compiler_params=pltpu.CompilerParams(
            dimension_semantics=("parallel",)),
    )(x_seq, wx)


def convgru_recurrent(xc_seq, wuh, woh, *, kw, width, t_block, m,
                      gate_precision):
    """Run the recurrent (h-path) part of one layer in ONE pallas_call.
    xc_seq: (T//TB, 2*Ch, TB*M) -> hidden sequence (T//TB, Ch, TB*M)."""
    n_blk, co2, lanes = xc_seq.shape
    ch = wuh.shape[0]
    kernel = functools.partial(_recurrent_kernel, kw=kw, width=width,
                               t_block=t_block, m=m,
                               gate_precision=gate_precision)
    grid_spec = pltpu.PrefetchScalarGridSpec(
        num_scalar_prefetch=0,
        grid=(n_blk,),
        in_specs=[
            pl.BlockSpec((1, co2, lanes), lambda t: (t, 0, 0)),  # xc block
            pl.BlockSpec(wuh.shape, lambda t: (0, 0)),           # resident
            pl.BlockSpec(woh.shape, lambda t: (0, 0)),           # resident
        ],
        out_specs=pl.BlockSpec((1, ch, lanes), lambda t: (t, 0, 0)),
        scratch_shapes=[pltpu.VMEM((ch, m), jnp.float32)],       # persistent h
    )
    return pl.pallas_call(
        kernel,
        out_shape=jax.ShapeDtypeStruct((n_blk, ch, lanes), jnp.float32),
        grid_spec=grid_spec,
        compiler_params=pltpu.CompilerParams(
            # recurrence through the h scratch -> time-block axis sequential
            dimension_semantics=("arbitrary",)),
    )(xc_seq, wuh, woh)


# ---------------------------- parameter handling ----------------------------

def _orthogonal(key, rows, cols):
    """nn.init.orthogonal_ semantics (up to RNG): orthonormal rows when
    rows <= cols, orthonormal columns otherwise."""
    a = jax.random.normal(key, (rows, cols), dtype=jnp.float32)
    if rows < cols:
        q, _ = jnp.linalg.qr(a.T)
        return q[:, :rows].T
    q, _ = jnp.linalg.qr(a)
    return q[:, :cols]


def init_convgru_torch_params(key, input_size, hidden_sizes, kernel_sizes, n_layers):
    """Per-layer parameters in the PyTorch Conv2d layout
    (weight: (Ch, Ci+Ch, 1, kw), bias: (Ch,)).  reset_gate params are omitted
    because the source forward never uses them."""
    if not isinstance(hidden_sizes, (list, tuple)):
        hidden_sizes = [hidden_sizes] * n_layers
    if not isinstance(kernel_sizes, list) or isinstance(kernel_sizes[0], int):
        kernel_sizes = [tuple(kernel_sizes)] * n_layers
    params = []
    for i in range(n_layers):
        ci = input_size if i == 0 else hidden_sizes[i - 1]
        ch = hidden_sizes[i]
        kh, kw = kernel_sizes[i]
        assert kh == 1, "padding=(0, kw//2) preserves H only for kernel height 1"
        ctot = ci + ch
        key, ku, ko = jax.random.split(key, 3)
        w_update = _orthogonal(ku, ch, ctot * kw).reshape(ch, ctot, 1, kw)
        w_out = _orthogonal(ko, ch, ctot * kw).reshape(ch, ctot, 1, kw)
        params.append(dict(
            w_update=w_update, b_update=jnp.zeros((ch,), jnp.float32),
            w_out=w_out, b_out=jnp.zeros((ch,), jnp.float32),
            input_size=ci, hidden_size=ch, kw=kw))
    return params


def pack_layer_params(torch_params):
    """Convert torch-layout gate weights into the kernel layout:
      wx : (2*Ch, kw*Ci_pad)  x-path weights of [update; out], taps along K
      wuh: (Ch, kw*Ch)        h-path update-gate weights, taps along K
      woh: (Ch, kw*Ch)        h-path out-gate weights, taps along K
    Gate biases are dropped: a per-channel constant cancels exactly under the
    training-mode BN (and the source zero-initializes them).  Input channels
    are zero-padded to a sublane multiple (8; use 16 for bf16 operands)."""
    packed = []
    for p in torch_params:
        ci, ch, kw = p["input_size"], p["hidden_size"], p["kw"]
        ci_pad = _round_up(ci, 8)
        wu, wo = p["w_update"], p["w_out"]          # (Ch, Ci+Ch, 1, kw)

        def pad_x(wpart):                           # (Ch, Ci) -> (Ch, ci_pad)
            return jnp.pad(wpart, ((0, 0), (0, ci_pad - ci)))

        wx = jnp.concatenate(
            [jnp.concatenate([pad_x(wu[:, :ci, 0, dw]), pad_x(wo[:, :ci, 0, dw])],
                             axis=0)
             for dw in range(kw)], axis=1)          # (2*Ch, kw*ci_pad)
        wuh = jnp.concatenate([wu[:, ci:, 0, dw] for dw in range(kw)], axis=1)
        woh = jnp.concatenate([wo[:, ci:, 0, dw] for dw in range(kw)], axis=1)
        packed.append(dict(wx=wx, wuh=wuh, woh=woh, kw=kw, ci_pad=ci_pad))
    return packed


# ------------------------------ top-level model ------------------------------

def convgru_forward(x, packed_params, gate_precision=None):
    """x: (N, T, C, H, W), the PyTorch layout.  Returns a list (one entry per
    layer) of (N, T, Ch, H, W) arrays == ConvGRU.forward's layer_output_list.

    gate_precision: MXU precision for the gate matmuls.  None (default) ->
    single-pass MXU (fast path); jax.lax.Precision.HIGHEST -> near-f32."""
    n, t_len, c, hgt, wid = x.shape
    m = n * hgt * wid
    tb = _pick_time_block(t_len)
    n_blk = t_len // tb
    lanes = tb * m
    # (N,T,C,H,W) -> (T//TB, C, TB*M): channels on sublanes; timesteps of the
    # block, batch and spatial flattened onto lanes (width minor, so the
    # `lane % W` conv edge masks stay valid).  lanes % 128 == 0 here.
    inp = jnp.transpose(x, (1, 2, 0, 3, 4)).reshape(n_blk, tb, c, m)
    inp = jnp.transpose(inp, (0, 2, 1, 3)).reshape(n_blk, c, lanes)
    inp = inp.astype(jnp.float32)

    outputs = []
    for p in packed_params:
        ch = p["wuh"].shape[0]
        ci_pad = p["ci_pad"]
        if inp.shape[1] != ci_pad:  # zero-pad channels to a sublane multiple
            inp = jnp.concatenate(
                [inp, jnp.zeros((n_blk, ci_pad - inp.shape[1], lanes), inp.dtype)],
                axis=1)
        # Non-recurrent x projection (parallel grid; both TCs on v7x) ...
        xc = conv_x_projection(inp, p["wx"], kw=p["kw"], width=wid,
                               gate_precision=gate_precision)
        # ... then the sequential h-path recurrence.
        out = convgru_recurrent(xc, p["wuh"], p["woh"], kw=p["kw"], width=wid,
                                t_block=tb, m=m, gate_precision=gate_precision)
        inp = out  # next layer consumes the (T//TB, Ch, TB*M) sequence directly
        # back to the PyTorch (N, T, Ch, H, W) layout once, at the very end
        o5 = out.reshape(n_blk, ch, tb, n, hgt, wid)
        o5 = jnp.transpose(o5, (3, 0, 2, 1, 4, 5)).reshape(n, t_len, ch, hgt, wid)
        outputs.append(o5)
    return outputs


# -------------------- pure-JAX reference (PyTorch transcription) -------------

def _reference_cell(x, h, w_u, b_u, w_o, b_o):
    pad = w_u.shape[-1] // 2

    def conv(inp, w, b):
        out = jax.lax.conv_general_dilated(
            inp, w, window_strides=(1, 1), padding=((0, 0), (pad, pad)),
            dimension_numbers=("NCHW", "OIHW", "NCHW"),
            precision=jax.lax.Precision.HIGHEST)
        return out + b.reshape(1, -1, 1, 1)

    def bn(y):
        mean = jnp.mean(y, axis=(0, 2, 3), keepdims=True)
        var = jnp.mean((y - mean) ** 2, axis=(0, 2, 3), keepdims=True)
        return (y - mean) * jax.lax.rsqrt(var + BN_EPS)

    stacked = jnp.concatenate([x, h], axis=1)
    gate = jax.nn.sigmoid(bn(conv(stacked, w_u, b_u)))
    update = gate
    reset = gate  # source quirk: the reset path also uses update_gate
    out_in = jnp.tanh(bn(conv(jnp.concatenate([x, h * reset], axis=1), w_o, b_o)))
    return h * (1.0 - update) + out_in * update


def convgru_forward_reference(x, torch_params):
    n, t_len, c, hgt, wid = x.shape
    inp = x.astype(jnp.float32)
    outputs = []
    for p in torch_params:
        ch = p["hidden_size"]
        h = jnp.zeros((n, ch, hgt, wid), jnp.float32)
        outs = []
        for t in range(t_len):
            h = _reference_cell(inp[:, t], h, p["w_update"], p["b_update"],
                                p["w_out"], p["b_out"])
            outs.append(h)
        layer_out = jnp.stack(outs, axis=1)   # (N, T, Ch, H, W)
        inp = layer_out
        outputs.append(layer_out)
    return outputs


if __name__ == "__main__":
    key = jax.random.PRNGKey(0)
    k_x, k_p = jax.random.split(key)

    # small shapes consistent with the module's 5D input (N, T, C, H, W)
    N, T, Cin, H, W = 2, 8, 4, 8, 16
    hidden_sizes = 8
    kernel_sizes = (1, 3)
    n_layers = 2

    x = jax.random.normal(k_x, (N, T, Cin, H, W), dtype=jnp.float32)
    torch_params = init_convgru_torch_params(k_p, Cin, hidden_sizes,
                                             kernel_sizes, n_layers)
    packed_params = pack_layer_params(torch_params)

    # ---- fast path (default single-pass MXU for the gate matmuls) ----
    outputs = convgru_forward(x, packed_params, gate_precision=None)
    outputs = [jax.block_until_ready(o) for o in outputs]
    assert len(outputs) == n_layers
    for o in outputs:
        assert o.shape == (N, T, hidden_sizes, H, W)
        assert bool(jnp.all(jnp.isfinite(o)))

    refs = convgru_forward_reference(x, torch_params)
    # Loose sanity bound: single-pass MXU rounds operands to bf16, and the
    # rounding compounds across T timesteps and 2 layers of the recurrence.
    for li, (o, r) in enumerate(zip(outputs, refs)):
        err = float(jnp.max(jnp.abs(o - r)))
        assert err < 8e-2, f"[fast] layer {li}: max |pallas - reference| = {err}"

    # ---- structural check: same kernels, HIGHEST MXU precision, tight tol ----
    outputs_hi = convgru_forward(x, packed_params,
                                 gate_precision=jax.lax.Precision.HIGHEST)
    outputs_hi = [jax.block_until_ready(o) for o in outputs_hi]
    for li, (o, r) in enumerate(zip(outputs_hi, refs)):
        err = float(jnp.max(jnp.abs(o - r)))
        assert err < 5e-3, f"[highest] layer {li}: max |pallas - reference| = {err}"

    print("KERNEL_OK")
</pallas_src>

<mosaic_0001>
module attributes {stable_mosaic.version = 11 : i64} {
  func.func @_xproj_kernel(%arg0: i32, %arg1: memref<1x8x1024xf32, #tpu.memory_space<vmem>>, %arg2: memref<16x24xf32, #tpu.memory_space<vmem>>, %arg3: memref<1x16x1024xf32, #tpu.memory_space<vmem>>) attributes {dimension_semantics = [#tpu.dimension_semantics<parallel>], iteration_bounds = array<i64: 2>, scalar_prefetch = 0 : i64, scratch_operands = 0 : i64, tpu.core_type = #tpu.core_type<tc>, window_params = [{transform_indices = @transform_0, window_bounds = array<i64: 1, 8, 1024>}, {pipeline_mode = #tpu.pipeline_mode<synchronous>, transform_indices = @transform_1, window_bounds = array<i64: 16, 24>}, {transform_indices = @transform_2, window_bounds = array<i64: 1, 16, 1024>}]} {
    %c0 = arith.constant 0 : index
    %c0_0 = arith.constant 0 : index
    %c0_1 = arith.constant 0 : index
    %0 = vector.load %arg1[%c0, %c0_0, %c0_1] : memref<1x8x1024xf32, #tpu.memory_space<vmem>>, vector<1x8x1024xf32>
    %1 = vector.shape_cast %0 : vector<1x8x1024xf32> to vector<8x1024xf32>
    %2 = tpu.iota {dimensions = array<i32: 1>} : vector<1x1024xi32>
    %c16_i32 = arith.constant 16 : i32
    %c0_i32 = arith.constant 0 : i32
    %3 = arith.cmpi eq, %c16_i32, %c0_i32 : i32
    %c1_i32 = arith.constant 1 : i32
    %4 = arith.select %3, %c1_i32, %c16_i32 : i32
    %5 = vector.broadcast %4 : i32 to vector<1x1024xi32>
    %6 = arith.remsi %2, %5 : vector<1x1024xi32>
    %c0_i32_2 = arith.constant 0 : i32
    %7 = vector.broadcast %c0_i32_2 : i32 to vector<1x1024xi32>
    %8 = arith.cmpi ne, %6, %7 : vector<1x1024xi32>
    %c0_i32_3 = arith.constant 0 : i32
    %9 = vector.broadcast %c0_i32_3 : i32 to vector<1x1024xi32>
    %10 = arith.cmpi slt, %6, %9 : vector<1x1024xi32>
    %c0_i32_4 = arith.constant 0 : i32
    %11 = arith.cmpi slt, %4, %c0_i32_4 : i32
    %12 = vector.broadcast %11 : i1 to vector<1x1024xi1>
    %13 = vector.broadcast %12 : vector<1x1024xi1> to vector<1x1024xi1>
    %14 = arith.xori %10, %13 : vector<1x1024xi1>
    %15 = arith.andi %14, %8 : vector<1x1024xi1>
    %16 = vector.broadcast %4 : i32 to vector<1x1024xi32>
    %17 = arith.addi %6, %16 : vector<1x1024xi32>
    %18 = arith.select %15, %17, %6 : vector<1x1024xi1>, vector<1x1024xi32>
    %c1_i32_5 = arith.constant 1 : i32
    %19 = vector.broadcast %c1_i32_5 : i32 to vector<1x1024xi32>
    %20 = arith.cmpi sge, %18, %19 : vector<1x1024xi32>
    %21 = arith.extui %20 : vector<1x1024xi1> to vector<1x1024xi32>
    %22 = arith.sitofp %21 : vector<1x1024xi32> to vector<1x1024xf32>
    %c15_i32 = arith.constant 15 : i32
    %23 = vector.broadcast %c15_i32 : i32 to vector<1x1024xi32>
    %24 = arith.cmpi slt, %18, %23 : vector<1x1024xi32>
    %25 = arith.extui %24 : vector<1x1024xi1> to vector<1x1024xi32>
    %26 = arith.sitofp %25 : vector<1x1024xi32> to vector<1x1024xf32>
    %c1_i32_6 = arith.constant 1 : i32
    %27 = tpu.dynamic_rotate %1 by %c1_i32_6 dim 1 : vector<8x1024xf32>, i32 -> vector<8x1024xf32>
    %28 = vector.broadcast %22 : vector<1x1024xf32> to vector<8x1024xf32>
    %29 = arith.mulf %27, %28 : vector<8x1024xf32>
    %c1023_i32 = arith.constant 1023 : i32
    %30 = tpu.dynamic_rotate %1 by %c1023_i32 dim 1 : vector<8x1024xf32>, i32 -> vector<8x1024xf32>
    %31 = vector.broadcast %26 : vector<1x1024xf32> to vector<8x1024xf32>
    %32 = arith.mulf %30, %31 : vector<8x1024xf32>
    %33 = tpu.concatenate %29, %1, %32 in 0 : vector<8x1024xf32>, vector<8x1024xf32>, vector<8x1024xf32> -> vector<24x1024xf32>
    %c0_7 = arith.constant 0 : index
    %c0_8 = arith.constant 0 : index
    %34 = vector.load %arg2[%c0_7, %c0_8] : memref<16x24xf32, #tpu.memory_space<vmem>>, vector<16x24xf32>
    %cst = arith.constant dense<0.000000e+00> : vector<16x1024xf32>
    %35 = tpu.matmul %34, %33, %cst {dimension_numbers = #tpu.dot_dimension_numbers<[1], [0], [0], [1], [0, 0, 1, 1], [], []>} : vector<16x24xf32>, vector<24x1024xf32>, vector<16x1024xf32> -> vector<16x1024xf32>
    %c0_9 = arith.constant 0 : index
    %c0_10 = arith.constant 0 : index
    %c0_11 = arith.constant 0 : index
    %36 = vector.load %arg3[%c0_9, %c0_10, %c0_11] : memref<1x16x1024xf32, #tpu.memory_space<vmem>>, vector<1x16x1024xf32>
    %37 = vector.shape_cast %36 : vector<1x16x1024xf32> to vector<16x1024xf32>
    %38 = vector.shape_cast %35 : vector<16x1024xf32> to vector<1x16x1024xf32>
    tpu.vector_store %arg3[%c0_9, %c0_10, %c0_11], %38 {strides = array<i32>} : memref<1x16x1024xf32, #tpu.memory_space<vmem>>, vector<1x16x1024xf32>,
    return
  }
  func.func @transform_0(%arg0: i32) -> (i32, i32, i32) {
    %c0_i32 = arith.constant 0 : i32
    %c0_i32_0 = arith.constant 0 : i32
    %c0_i32_1 = arith.constant 0 : i32
    return %arg0, %c0_i32, %c0_i32_0 : i32, i32, i32
  }
  func.func @transform_1(%arg0: i32) -> (i32, i32) {
    %c0_i32 = arith.constant 0 : i32
    %c0_i32_0 = arith.constant 0 : i32
    %c0_i32_1 = arith.constant 0 : i32
    return %c0_i32, %c0_i32_0 : i32, i32
  }
  func.func @transform_2(%arg0: i32) -> (i32, i32, i32) {
    %c0_i32 = arith.constant 0 : i32
    %c0_i32_0 = arith.constant 0 : i32
    %c0_i32_1 = arith.constant 0 : i32
    return %arg0, %c0_i32, %c0_i32_0 : i32, i32, i32
  }
}

</mosaic_0001>

<llo_original>
// kernel: tpu_custom_call.1
$region0: #{tpu_custom_call.1}
  #allocation0 [shape = 'u32[]', space=smem, size = 0x4, offset = 0x4, fixed_abs, tag = 'smem constant byte address 0x4 - core index']
  #allocation1 [shape = 'u32[72,128]{1,0:T(1,128)}', space=vmem, size = 0x9000, scoped, tag = 'internal scratch']
  %s0 = inlined_call_operand.hbm [shape: f32[2,8,1024], index: 0, kind: input, shape index: {}]
  %s1 = inlined_call_operand.hbm [shape: f32[16,24], index: 1, kind: input, shape index: {}]
  %s2 = inlined_call_operand.hbm [shape: f32[2,16,1024], index: 2, kind: output, shape index: {}]
  %s3 = sld [smem:[#allocation0]]
  $region49: #{tpu_custom_call.1} parent=0
    _
  %s5 = ssub.s32 1, %s3
  %s6 = scalar_select 0, %s5, %s3
  $region1: #{tpu_custom_call.1} parent=0
    #allocation2 [shape = 'u8[65536]{0}', space=vmem, size = 0x10000, scoped, tag = 'input window, operand 0']
    #allocation3 [shape = 's32[2]{0}', space=sflag, size = 0x8, scoped, tag = 'scoped memory for tpu_custom_call.1']
    #allocation4 [shape = 's32[2]{0}', space=sflag, size = 0x8, scoped, tag = 'scoped memory for tpu_custom_call.1']
    #allocation5 [shape = 'u8[8192]{0}', space=vmem, size = 0x2000, scoped, tag = 'input window, operand 1, single buffered']
    #allocation6 [shape = 's32[1]{0}', space=sflag, size = 0x4, scoped, tag = 'scoped memory for tpu_custom_call.1']
    #allocation7 [shape = 'u8[131072]{0}', space=vmem, size = 0x20000, scoped, tag = 'output window, operand 0']
    %7 = vsyncpa [#allocation3], 0
    %s8 = scalar_lea.sflag [#allocation3], 1
    %9 = vsyncpa %s8, 0
    %10 = vsyncpa [#allocation6], 0
    %11 = vsyncpa [#allocation4], 0
    %s12 = scalar_lea.sflag [#allocation4], 1
    %13 = vsyncpa %s12, 0
    loop: start=0, step=1, limit=4
    $region2: #{tpu_custom_call.1} parent=1 // loop_pre_header
      _
    $region3: #{tpu_custom_call.1} parent=1 // loop_header
      %s15 = sphi 0, %s19
      %p16 = scmp.ge.s32.totalorder %s15, 4
      %s25 = sphi 0, %s27
      %s28 = sphi 0, %s25
      %s29 = sphi 0, %s28
      %s45 = sphi 0, %s29
      %s49 = sphi 0, %s49
      %s51 = sphi 0, %s49
      %s52 = sphi 0, %s51
      %s66 = sphi 0, %s52
      %s72 = sphi 0, %s74
      %s75 = sphi 0, %s72
      %s76 = sphi 0, %s75
      %s92 = sphi 0, %s76
    $region4: #{tpu_custom_call.1} parent=1 // loop_header_branch
      %18 = sbr.rel (%p16) target = $region8
    $region5: #{tpu_custom_call.1} parent=1 // loop_body
      %s20 = ssub.s32 %s15, 1
      %s21 = ssub.s32 %s15, 2
      %s22 = sadd.s32 %s15, 1
      %s23 = ssub.s32 %s15, %s22
      %p24 = scmp.eq.s32.totalorder %s23, 0
      %s26 = sadd.s32 %s25, 1
      %s27 = scalar_select %p24, %s25, %s26
      %p30 = pneg %p24
      %p31 = scmp.eq.s32.totalorder %s15, 1
      %p32 = por %p30, %p31
      %p33 = scmp.ne.s32.totalorder %s25, %s28
      %p34 = scmp.eq.s32.totalorder %s15, 0
      %p35 = por %p33, %p34
      %p36 = scmp.ne.s32.totalorder %s25, %s28
      %p37 = scmp.eq.s32.totalorder %s20, 1
      %p38 = por %p36, %p37
      %p39 = scmp.ne.s32.totalorder %s28, %s29
      %p40 = scmp.eq.s32.totalorder %s20, 0
      %p41 = por %p39, %p40
      %p42 = scmp.ne.s32.totalorder %s28, %s29
      %p43 = scmp.eq.s32.totalorder %s21, 1
      %p44 = por %p42, %p43
      %p46 = scmp.ne.s32.totalorder %s29, %s45
      %p47 = scmp.eq.s32.totalorder %s21, 0
      %p48 = por %p46, %p47
      %s50 = sadd.s32 %s49, 1
      %p53 = scmp.eq.s32.totalorder %s15, 1
      %p54 = scmp.ne.s32.totalorder %s49, %s51
      %p55 = scmp.eq.s32.totalorder %s15, 0
      %p56 = por %p54, %p55
      %p57 = scmp.ne.s32.totalorder %s49, %s51
      %p58 = scmp.eq.s32.totalorder %s20, 1
      %p59 = por %p57, %p58
      %p60 = scmp.ne.s32.totalorder %s51, %s52
      %p61 = scmp.eq.s32.totalorder %s20, 0
      %p62 = por %p60, %p61
      %p63 = scmp.ne.s32.totalorder %s51, %s52
      %p64 = scmp.eq.s32.totalorder %s21, 1
      %p65 = por %p63, %p64
      %p67 = scmp.ne.s32.totalorder %s52, %s66
      %p68 = scmp.eq.s32.totalorder %s21, 0
      %p69 = por %p67, %p68
      %s70 = ssub.s32 %s15, %s22
      %p71 = scmp.eq.s32.totalorder %s70, 0
      %s73 = sadd.s32 %s72, 1
      %s74 = scalar_select %p71, %s72, %s73
      %p77 = pneg %p71
      %p78 = scmp.eq.s32.totalorder %s15, 1
      %p79 = por %p77, %p78
      %p80 = scmp.ne.s32.totalorder %s72, %s75
      %p81 = scmp.eq.s32.totalorder %s15, 0
      %p82 = por %p80, %p81
      %p83 = scmp.ne.s32.totalorder %s72, %s75
      %p84 = scmp.eq.s32.totalorder %s20, 1
      %p85 = por %p83, %p84
      %p86 = scmp.ne.s32.totalorder %s75, %s76
      %p87 = scmp.eq.s32.totalorder %s20, 0
      %p88 = por %p86, %p87
      %p89 = scmp.ne.s32.totalorder %s75, %s76
      %p90 = scmp.eq.s32.totalorder %s21, 1
      %p91 = por %p89, %p90
      %p93 = scmp.ne.s32.totalorder %s76, %s92
      %p94 = scmp.eq.s32.totalorder %s21, 0
      %p95 = por %p93, %p94
      %p96 = scmp.le.s32.totalorder 1, %s15
      %p97 = scmp.lt.s32.totalorder %s15, 3
      %p98 = pnand %p96, %p97
      %p99 = pneg %p98
      // Predicated region
      $region9: #{tpu_custom_call.1} parent=5 // pred_check
        _
      $region10: #{tpu_custom_call.1} parent=5 // pred_check_branch
        %101 = sbr.rel (%p98) target = $region12
      $region11: #{tpu_custom_call.1} parent=5 // pred_region
        %s102 = ssub.s32 %s15, 1
        // Predicated region
        $region13: #{tpu_custom_call.1} parent=11 // pred_check
          %p103 = pneg %p62
        $region14: #{tpu_custom_call.1} parent=11 // pred_check_branch
          %105 = sbr.rel (%p103) target = $region16
        $region15: #{tpu_custom_call.1} parent=11 // pred_region
          %107 = vsyncadd [#allocation6], 0
          %s108 = sshll.u32 %s1, 4
          %s109 = int_to_ptr.hbm [resolvable:$true] %s108
          %s110 = sshll.u32 [#allocation5], 4
          %s111 = int_to_ptr.vmem [resolvable:$true] %s110
          %116 = dma.hbm_to_vmem [thread:$0]  %s109, 256, %s111, [#allocation6], 128, 128, 8
        $region16: #{tpu_custom_call.1} parent=11 // pred_fallthru
          _
      $region12: #{tpu_custom_call.1} parent=5 // pred_fallthru
        _
      %p117 = scmp.lt.s32.totalorder %s15, 2
      // Predicated region
      $region17: #{tpu_custom_call.1} parent=5 // pred_check
        %p118 = pneg %p117
      $region18: #{tpu_custom_call.1} parent=5 // pred_check_branch
        %120 = sbr.rel (%p118) target = $region20
      $region19: #{tpu_custom_call.1} parent=5 // pred_region
        // Predicated region
        $region21: #{tpu_custom_call.1} parent=19 // pred_check
          %p121 = pneg %p35
        $region22: #{tpu_custom_call.1} parent=19 // pred_check_branch
          %123 = sbr.rel (%p121) target = $region24
        $region23: #{tpu_custom_call.1} parent=19 // pred_region
          %s124 = sand.u32 %s25, 1
          %s125 = scalar_lea.sflag [#allocation3], %s124
          %s126 = sand.u32 %s25, 1
          %s127 = smul.addr %s126, 64
          %s128 = scalar_lea.vmem [#allocation2], %s127
          %130 = vsyncadd %s125, 0
          %s131 = smul.addr %s15, 8
          %s132 = smul.addr %s131, 8
          %s133 = scalar_lea.hbm %s0, %s132
          %s135 = sshll.u32 %s133, 4
          %s136 = int_to_ptr.hbm [resolvable:$true] %s135
          %s137 = sshll.u32 %s128, 4
          %s138 = int_to_ptr.vmem [resolvable:$true] %s137
          %140 = dma.hbm_to_vmem [thread:$0]  %s136, 1024, %s138, %s125
        $region24: #{tpu_custom_call.1} parent=19 // pred_fallthru
          _
      $region20: #{tpu_custom_call.1} parent=5 // pred_fallthru
        _
      %p141 = scmp.le.s32.totalorder 1, %s15
      %p142 = scmp.lt.s32.totalorder %s15, 3
      %p143 = pnand %p141, %p142
      %p144 = pneg %p143
      // Predicated region
      $region25: #{tpu_custom_call.1} parent=5 // pred_check
        _
      $region26: #{tpu_custom_call.1} parent=5 // pred_check_branch
        %146 = sbr.rel (%p143) target = $region28
      $region27: #{tpu_custom_call.1} parent=5 // pred_region
        %s147 = ssub.s32 %s15, 1
        %s148 = sand.u32 %s28, 1
        %s149 = scalar_lea.sflag [#allocation3], %s148
        %s150 = sand.u32 %s28, 1
        %s151 = smul.addr %s150, 64
        %s152 = scalar_lea.vmem [#allocation2], %s151
        // Predicated region
        $region29: #{tpu_custom_call.1} parent=27 // pred_check
          %p153 = pneg %p41
        $region30: #{tpu_custom_call.1} parent=27 // pred_check_branch
          %155 = sbr.rel (%p153) target = $region32
        $region31: #{tpu_custom_call.1} parent=27 // pred_region
          %157 = dma.done %s149, 1024
        $region32: #{tpu_custom_call.1} parent=27 // pred_fallthru
          _
        // Predicated region
        $region33: #{tpu_custom_call.1} parent=27 // pred_check
          %p158 = pneg %p62
        $region34: #{tpu_custom_call.1} parent=27 // pred_check_branch
          %160 = sbr.rel (%p158) target = $region36
        $region35: #{tpu_custom_call.1} parent=27 // pred_region
          %162 = dma.done [#allocation6], 256
        $region36: #{tpu_custom_call.1} parent=27 // pred_fallthru
          _
        %s163 = sand.u32 %s28, 1
        %s164 = scalar_lea.sflag [#allocation3], %s163
        %s165 = sand.u32 %s28, 1
        %s166 = smul.addr %s165, 64
        %s167 = scalar_lea.vmem [#allocation2], %s166
        %p168 = pneg %p41
        %p169 = pneg %p38
        %p170 = pneg %p62
        %p171 = pneg %p59
        %p172 = pneg %p88
        %p173 = pneg %p85
        %s174 = sand.u32 %s75, 1
        %s175 = scalar_lea.sflag [#allocation4], %s174
        %s176 = sand.u32 %s75, 1
        %s177 = smul.addr %s176, 128
        %s178 = scalar_lea.vmem [#allocation7], %s177
        %v179 = vld [vmem:[%s152] sm:$0xff]
        %v180 = vld [vmem:[%s152 + $0x8] sm:$0xff]
        %v181 = vld [vmem:[%s152 + $0x10] sm:$0xff]
        %v182 = vld [vmem:[%s152 + $0x18] sm:$0xff]
        %v183 = vld [vmem:[%s152 + $0x20] sm:$0xff]
        %v184 = vld [vmem:[%s152 + $0x28] sm:$0xff]
        %v185 = vld [vmem:[%s152 + $0x30] sm:$0xff]
        %v186 = vld [vmem:[%s152 + $0x38] sm:$0xff]
        %v187 = vlaneseq
        %v188 = vand.u32 %v187, 127
        %v189 = vadd.s32 %v188, 128
        %v190 = vadd.s32 %v188, 256
        %v191 = vadd.s32 %v188, 384
        %v192 = vadd.s32 %v188, 512
        %v193 = vadd.s32 %v188, 640
        %v194 = vadd.s32 %v188, 768
        %v195 = vadd.s32 %v188, 896
        %vm196 = vcmp.lt.s32.totalorder %v188, 0
        %v197 = vsub.s32 0, %v188
        %v198 = vsel %vm196, %v197, %v188
        %v199 = vshrl.u32 %v198, 4
        %v200 = vand.u32 %v198, 15
        %v201 = vsub.s32 0, %v200
        %v202 = vsel %vm196, %v201, %v200
        %vm203 = vcmp.lt.s32.totalorder %v189, 0
        %v204 = vsub.s32 0, %v189
        %v205 = vsel %vm203, %v204, %v189
        %v206 = vshrl.u32 %v205, 4
        %v207 = vand.u32 %v205, 15
        %v208 = vsub.s32 0, %v207
        %v209 = vsel %vm203, %v208, %v207
        %vm210 = vcmp.lt.s32.totalorder %v190, 0
        %v211 = vsub.s32 0, %v190
        %v212 = vsel %vm210, %v211, %v190
        %v213 = vshrl.u32 %v212, 4
        %v214 = vand.u32 %v212, 15
        %v215 = vsub.s32 0, %v214
        %v216 = vsel %vm210, %v215, %v214
        %vm217 = vcmp.lt.s32.totalorder %v191, 0
        %v218 = vsub.s32 0, %v191
        %v219 = vsel %vm217, %v218, %v191
        %v220 = vshrl.u32 %v219, 4
        %v221 = vand.u32 %v219, 15
        %v222 = vsub.s32 0, %v221
        %v223 = vsel %vm217, %v222, %v221
        %vm224 = vcmp.lt.s32.totalorder %v192, 0
        %v225 = vsub.s32 0, %v192
        %v226 = vsel %vm224, %v225, %v192
        %v227 = vshrl.u32 %v226, 4
        %v228 = vand.u32 %v226, 15
        %v229 = vsub.s32 0, %v228
        %v230 = vsel %vm224, %v229, %v228
        %vm231 = vcmp.lt.s32.totalorder %v193, 0
        %v232 = vsub.s32 0, %v193
        %v233 = vsel %vm231, %v232, %v193
        %v234 = vshrl.u32 %v233, 4
        %v235 = vand.u32 %v233, 15
        %v236 = vsub.s32 0, %v235
        %v237 = vsel %vm231, %v236, %v235
        %vm238 = vcmp.lt.s32.totalorder %v194, 0
        %v239 = vsub.s32 0, %v194
        %v240 = vsel %vm238, %v239, %v194
        %v241 = vshrl.u32 %v240, 4
        %v242 = vand.u32 %v240, 15
        %v243 = vsub.s32 0, %v242
        %v244 = vsel %vm238, %v243, %v242
        %vm245 = vcmp.lt.s32.totalorder %v195, 0
        %v246 = vsub.s32 0, %v195
        %v247 = vsel %vm245, %v246, %v195
        %v248 = vshrl.u32 %v247, 4
        %v249 = vand.u32 %v247, 15
        %v250 = vsub.s32 0, %v249
        %v251 = vsel %vm245, %v250, %v249
        %vm252 = vcmp.ne.s32.totalorder %v202, 0
        %vm253 = vcmp.ne.s32.totalorder %v209, 0
        %vm254 = vcmp.ne.s32.totalorder %v216, 0
        %vm255 = vcmp.ne.s32.totalorder %v223, 0
        %vm256 = vcmp.ne.s32.totalorder %v230, 0
        %vm257 = vcmp.ne.s32.totalorder %v237, 0
        %vm258 = vcmp.ne.s32.totalorder %v244, 0
        %vm259 = vcmp.ne.s32.totalorder %v251, 0
        %vm260 = vcmp.lt.s32.totalorder %v202, 0
        %vm261 = vcmp.lt.s32.totalorder %v209, 0
        %vm262 = vcmp.lt.s32.totalorder %v216, 0
        %vm263 = vcmp.lt.s32.totalorder %v223, 0
        %vm264 = vcmp.lt.s32.totalorder %v230, 0
        %vm265 = vcmp.lt.s32.totalorder %v237, 0
        %vm266 = vcmp.lt.s32.totalorder %v244, 0
        %vm267 = vcmp.lt.s32.totalorder %v251, 0
        %vm268 = vmand %vm260, %vm252
        %vm269 = vmand %vm261, %vm253
        %vm270 = vmand %vm262, %vm254
        %vm271 = vmand %vm263, %vm255
        %vm272 = vmand %vm264, %vm256
        %vm273 = vmand %vm265, %vm257
        %vm274 = vmand %vm266, %vm258
        %vm275 = vmand %vm267, %vm259
        %v276 = vadd.s32 %v202, 16
        %v277 = vadd.s32 %v209, 16
        %v278 = vadd.s32 %v216, 16
        %v279 = vadd.s32 %v223, 16
        %v280 = vadd.s32 %v230, 16
        %v281 = vadd.s32 %v237, 16
        %v282 = vadd.s32 %v244, 16
        %v283 = vadd.s32 %v251, 16
        %v284 = vsel %vm268, %v276, %v202
        %v285 = vsel %vm269, %v277, %v209
        %v286 = vsel %vm270, %v278, %v216
        %v287 = vsel %vm271, %v279, %v223
        %v288 = vsel %vm272, %v280, %v230
        %v289 = vsel %vm273, %v281, %v237
        %v290 = vsel %vm274, %v282, %v244
        %v291 = vsel %vm275, %v283, %v251
        %vm292 = vcmp.ge.s32.totalorder %v284, 1
        %vm293 = vcmp.ge.s32.totalorder %v285, 1
        %vm294 = vcmp.ge.s32.totalorder %v286, 1
        %vm295 = vcmp.ge.s32.totalorder %v287, 1
        %vm296 = vcmp.ge.s32.totalorder %v288, 1
        %vm297 = vcmp.ge.s32.totalorder %v289, 1
        %vm298 = vcmp.ge.s32.totalorder %v290, 1
        %vm299 = vcmp.ge.s32.totalorder %v291, 1
        %v300 = vsel %vm292, 1, 0
        %v301 = vsel %vm293, 1, 0
        %v302 = vsel %vm294, 1, 0
        %v303 = vsel %vm295, 1, 0
        %v304 = vsel %vm296, 1, 0
        %v305 = vsel %vm297, 1, 0
        %v306 = vsel %vm298, 1, 0
        %v307 = vsel %vm299, 1, 0
        %v308 = vcvt.s32.f32 %v300
        %v309 = vcvt.s32.f32 %v301
        %v310 = vcvt.s32.f32 %v302
        %v311 = vcvt.s32.f32 %v303
        %v312 = vcvt.s32.f32 %v304
        %v313 = vcvt.s32.f32 %v305
        %v314 = vcvt.s32.f32 %v306
        %v315 = vcvt.s32.f32 %v307
        %vm316 = vcmp.lt.s32.totalorder %v284, 15
        %vm317 = vcmp.lt.s32.totalorder %v285, 15
        %vm318 = vcmp.lt.s32.totalorder %v286, 15
        %vm319 = vcmp.lt.s32.totalorder %v287, 15
        %vm320 = vcmp.lt.s32.totalorder %v288, 15
        %vm321 = vcmp.lt.s32.totalorder %v289, 15
        %vm322 = vcmp.lt.s32.totalorder %v290, 15
        %vm323 = vcmp.lt.s32.totalorder %v291, 15
        %v324 = vsel %vm316, 1, 0
        %v325 = vsel %vm317, 1, 0
        %v326 = vsel %vm318, 1, 0
        %v327 = vsel %vm319, 1, 0
        %v328 = vsel %vm320, 1, 0
        %v329 = vsel %vm321, 1, 0
        %v330 = vsel %vm322, 1, 0
        %v331 = vsel %vm323, 1, 0
        %v332 = vcvt.s32.f32 %v324
        %v333 = vcvt.s32.f32 %v325
        %v334 = vcvt.s32.f32 %v326
        %v335 = vcvt.s32.f32 %v327
        %v336 = vcvt.s32.f32 %v328
        %v337 = vcvt.s32.f32 %v329
        %v338 = vcvt.s32.f32 %v330
        %v339 = vcvt.s32.f32 %v331
        %340 = vrot.lane.b32.xlu0 %v179, 1
        %v341 = vpop.permute.xlu0 %340
        %342 = vrot.lane.b32.xlu0 %v180, 1
        %v343 = vpop.permute.xlu0 %342
        %344 = vrot.lane.b32.xlu0 %v181, 1
        %v345 = vpop.permute.xlu0 %344
        %346 = vrot.lane.b32.xlu0 %v182, 1
        %v347 = vpop.permute.xlu0 %346
        %348 = vrot.lane.b32.xlu0 %v183, 1
        %v349 = vpop.permute.xlu0 %348
        %350 = vrot.lane.b32.xlu0 %v184, 1
        %v351 = vpop.permute.xlu0 %350
        %352 = vrot.lane.b32.xlu0 %v185, 1
        %v353 = vpop.permute.xlu0 %352
        %354 = vrot.lane.b32.xlu0 %v186, 1
        %v355 = vpop.permute.xlu0 %354
        %vm356 = vcmp.lt.s32.totalorder %v188, 1
        %v357 = vsel %vm356, %v353, %v355
        %v358 = vsel %vm356, %v351, %v353
        %v359 = vsel %vm356, %v349, %v351
        %v360 = vsel %vm356, %v347, %v349
        %v361 = vsel %vm356, %v345, %v347
        %v362 = vsel %vm356, %v343, %v345
        %v363 = vsel %vm356, %v341, %v343
        %v364 = vsel %vm356, %v355, %v341
        %v365 = vmul.f32 %v364, %v308
        %v366 = vmul.f32 %v363, %v309
        %v367 = vmul.f32 %v362, %v310
        %v368 = vmul.f32 %v361, %v311
        %v369 = vmul.f32 %v360, %v312
        %v370 = vmul.f32 %v359, %v313
        %v371 = vmul.f32 %v358, %v314
        %v372 = vmul.f32 %v357, %v315
        %373 = vrot.lane.b32.xlu0 %v179, 127
        %v374 = vpop.permute.xlu0 %373
        %375 = vrot.lane.b32.xlu0 %v180, 127
        %v376 = vpop.permute.xlu0 %375
        %377 = vrot.lane.b32.xlu0 %v181, 127
        %v378 = vpop.permute.xlu0 %377
        %379 = vrot.lane.b32.xlu0 %v182, 127
        %v380 = vpop.permute.xlu0 %379
        %381 = vrot.lane.b32.xlu0 %v183, 127
        %v382 = vpop.permute.xlu0 %381
        %383 = vrot.lane.b32.xlu0 %v184, 127
        %v384 = vpop.permute.xlu0 %383
        %385 = vrot.lane.b32.xlu0 %v185, 127
        %v386 = vpop.permute.xlu0 %385
        %387 = vrot.lane.b32.xlu0 %v186, 127
        %v388 = vpop.permute.xlu0 %387
        %vm389 = vcmp.lt.s32.totalorder %v188, 127
        %v390 = vsel %vm389, %v386, %v388
        %v391 = vsel %vm389, %v384, %v386
        %v392 = vsel %vm389, %v382, %v384
        %v393 = vsel %vm389, %v380, %v382
        %v394 = vsel %vm389, %v378, %v380
        %v395 = vsel %vm389, %v376, %v378
        %v396 = vsel %vm389, %v374, %v376
        %v397 = vsel %vm389, %v388, %v374
        %v398 = vmul.f32 %v396, %v332
        %v399 = vmul.f32 %v395, %v333
        %v400 = vmul.f32 %v394, %v334
        %v401 = vmul.f32 %v393, %v335
        %v402 = vmul.f32 %v392, %v336
        %v403 = vmul.f32 %v391, %v337
        %v404 = vmul.f32 %v390, %v338
        %v405 = vmul.f32 %v397, %v339
        %v406 = vld [vmem:[#allocation5] sm:$0xff]
        %v407 = vld [vmem:[#allocation5 + $0x8] sm:$0xff]
        %vm408 = vcmask 195584
        %v410 = vsel %vm408, %v406, 0
        %v413 = vsel %vm408, %v407, 0
        %415 = vmatpush.msra.mxu0 0.0
        %416 = vmatpush.msra.mxu0 0.0
        %417 = vmatpush.msra.mxu0 0.0
        %418 = vmatpush.msra.mxu0 0.0
        %419 = vmatpush.msra.mxu0 0.0
        %420 = vmatpush.msra.mxu0 0.0
        %421 = vmatpush.msra.mxu0 0.0
        %422 = vmatpush.msra.mxu0 0.0
        %423 = vmatpush.msra.mxu0 0.0
        %424 = vmatpush.msra.mxu0 0.0
        %425 = vmatpush.msra.mxu0 0.0
        %426 = vmatpush.msra.mxu0 0.0
        %427 = vmatpush.msra.mxu0 0.0
        %428 = vmatpush.msra.mxu0 %v398
        %429 = vmatpush.msra.mxu0 %v179
        %430 = vmatpush.msra.mxu0 %v365
        %431 = vmatmul.f32.gmra.mxu0 %v410
        %v432 = vpop.f32.mrf.mxu0
        %v433 = vadd.f32 0.0, %v432
        %434 = vmatmul.f32.gmra.mxu0 %v413
        %v435 = vpop.f32.mrf.mxu0
        %v436 = vadd.f32 0.0, %v435
        %437 = vdwg.mxu0
        %438 = vmatpush.msra.mxu0 0.0
        %439 = vmatpush.msra.mxu0 0.0
        %440 = vmatpush.msra.mxu0 0.0
        %441 = vmatpush.msra.mxu0 0.0
        %442 = vmatpush.msra.mxu0 0.0
        %443 = vmatpush.msra.mxu0 0.0
        %444 = vmatpush.msra.mxu0 0.0
        %445 = vmatpush.msra.mxu0 0.0
        %446 = vmatpush.msra.mxu0 0.0
        %447 = vmatpush.msra.mxu0 0.0
        %448 = vmatpush.msra.mxu0 0.0
        %449 = vmatpush.msra.mxu0 0.0
        %450 = vmatpush.msra.mxu0 0.0
        %451 = vmatpush.msra.mxu0 %v399
        %452 = vmatpush.msra.mxu0 %v180
        %453 = vmatpush.msra.mxu0 %v366
        %454 = vmatmul.f32.gmra.mxu0 %v410
        %v455 = vpop.f32.mrf.mxu0
        %v456 = vadd.f32 0.0, %v455
        %457 = vmatmul.f32.gmra.mxu0 %v413
        %v458 = vpop.f32.mrf.mxu0
        %v459 = vadd.f32 0.0, %v458
        %460 = vdwg.mxu0
        %461 = vmatpush.msra.mxu0 0.0
        %462 = vmatpush.msra.mxu0 0.0
        %463 = vmatpush.msra.mxu0 0.0
        %464 = vmatpush.msra.mxu0 0.0
        %465 = vmatpush.msra.mxu0 0.0
        %466 = vmatpush.msra.mxu0 0.0
        %467 = vmatpush.msra.mxu0 0.0
        %468 = vmatpush.msra.mxu0 0.0
        %469 = vmatpush.msra.mxu0 0.0
        %470 = vmatpush.msra.mxu0 0.0
        %471 = vmatpush.msra.mxu0 0.0
        %472 = vmatpush.msra.mxu0 0.0
        %473 = vmatpush.msra.mxu0 0.0
        %474 = vmatpush.msra.mxu0 %v400
        %475 = vmatpush.msra.mxu0 %v181
        %476 = vmatpush.msra.mxu0 %v367
        %477 = vmatmul.f32.gmra.mxu0 %v410
        %v478 = vpop.f32.mrf.mxu0
        %v479 = vadd.f32 0.0, %v478
        %480 = vmatmul.f32.gmra.mxu0 %v413
        %v481 = vpop.f32.mrf.mxu0
        %v482 = vadd.f32 0.0, %v481
        %483 = vdwg.mxu0
        %484 = vmatpush.msra.mxu0 0.0
        %485 = vmatpush.msra.mxu0 0.0
        %486 = vmatpush.msra.mxu0 0.0
        %487 = vmatpush.msra.mxu0 0.0
        %488 = vmatpush.msra.mxu0 0.0
        %489 = vmatpush.msra.mxu0 0.0
        %490 = vmatpush.msra.mxu0 0.0
        %491 = vmatpush.msra.mxu0 0.0
        %492 = vmatpush.msra.mxu0 0.0
        %493 = vmatpush.msra.mxu0 0.0
        %494 = vmatpush.msra.mxu0 0.0
        %495 = vmatpush.msra.mxu0 0.0
        %496 = vmatpush.msra.mxu0 0.0
        %497 = vmatpush.msra.mxu0 %v401
        %498 = vmatpush.msra.mxu0 %v182
        %499 = vmatpush.msra.mxu0 %v368
        %500 = vmatmul.f32.gmra.mxu0 %v410
        %v501 = vpop.f32.mrf.mxu0
        %v502 = vadd.f32 0.0, %v501
        %503 = vmatmul.f32.gmra.mxu0 %v413
        %v504 = vpop.f32.mrf.mxu0
        %v505 = vadd.f32 0.0, %v504
        %506 = vdwg.mxu0
        %507 = vmatpush.msra.mxu0 0.0
        %508 = vmatpush.msra.mxu0 0.0
        %509 = vmatpush.msra.mxu0 0.0
        %510 = vmatpush.msra.mxu0 0.0
        %511 = vmatpush.msra.mxu0 0.0
        %512 = vmatpush.msra.mxu0 0.0
        %513 = vmatpush.msra.mxu0 0.0
        %514 = vmatpush.msra.mxu0 0.0
        %515 = vmatpush.msra.mxu0 0.0
        %516 = vmatpush.msra.mxu0 0.0
        %517 = vmatpush.msra.mxu0 0.0
        %518 = vmatpush.msra.mxu0 0.0
        %519 = vmatpush.msra.mxu0 0.0
        %520 = vmatpush.msra.mxu0 %v402
        %521 = vmatpush.msra.mxu0 %v183
        %522 = vmatpush.msra.mxu0 %v369
        %523 = vmatmul.f32.gmra.mxu0 %v410
        %v524 = vpop.f32.mrf.mxu0
        %v525 = vadd.f32 0.0, %v524
        %526 = vmatmul.f32.gmra.mxu0 %v413
        %v527 = vpop.f32.mrf.mxu0
        %v528 = vadd.f32 0.0, %v527
        %529 = vdwg.mxu0
        %530 = vmatpush.msra.mxu0 0.0
        %531 = vmatpush.msra.mxu0 0.0
        %532 = vmatpush.msra.mxu0 0.0
        %533 = vmatpush.msra.mxu0 0.0
        %534 = vmatpush.msra.mxu0 0.0
        %535 = vmatpush.msra.mxu0 0.0
        %536 = vmatpush.msra.mxu0 0.0
        %537 = vmatpush.msra.mxu0 0.0
        %538 = vmatpush.msra.mxu0 0.0
        %539 = vmatpush.msra.mxu0 0.0
        %540 = vmatpush.msra.mxu0 0.0
        %541 = vmatpush.msra.mxu0 0.0
        %542 = vmatpush.msra.mxu0 0.0
        %543 = vmatpush.msra.mxu0 %v403
        %544 = vmatpush.msra.mxu0 %v184
        %545 = vmatpush.msra.mxu0 %v370
        %546 = vmatmul.f32.gmra.mxu0 %v410
        %v547 = vpop.f32.mrf.mxu0
        %v548 = vadd.f32 0.0, %v547
        %549 = vmatmul.f32.gmra.mxu0 %v413
        %v550 = vpop.f32.mrf.mxu0
        %v551 = vadd.f32 0.0, %v550
        %552 = vdwg.mxu0
        %553 = vmatpush.msra.mxu0 0.0
        %554 = vmatpush.msra.mxu0 0.0
        %555 = vmatpush.msra.mxu0 0.0
        %556 = vmatpush.msra.mxu0 0.0
        %557 = vmatpush.msra.mxu0 0.0
        %558 = vmatpush.msra.mxu0 0.0
        %559 = vmatpush.msra.mxu0 0.0
        %560 = vmatpush.msra.mxu0 0.0
        %561 = vmatpush.msra.mxu0 0.0
        %562 = vmatpush.msra.mxu0 0.0
        %563 = vmatpush.msra.mxu0 0.0
        %564 = vmatpush.msra.mxu0 0.0
        %565 = vmatpush.msra.mxu0 0.0
        %566 = vmatpush.msra.mxu0 %v404
        %567 = vmatpush.msra.mxu0 %v185
        %568 = vmatpush.msra.mxu0 %v371
        %569 = vmatmul.f32.gmra.mxu0 %v410
        %v570 = vpop.f32.mrf.mxu0
        %v571 = vadd.f32 0.0, %v570
        %572 = vmatmul.f32.gmra.mxu0 %v413
        %v573 = vpop.f32.mrf.mxu0
        %v574 = vadd.f32 0.0, %v573
        %575 = vdwg.mxu0
        %576 = vmatpush.msra.mxu0 0.0
        %577 = vmatpush.msra.mxu0 0.0
        %578 = vmatpush.msra.mxu0 0.0
        %579 = vmatpush.msra.mxu0 0.0
        %580 = vmatpush.msra.mxu0 0.0
        %581 = vmatpush.msra.mxu0 0.0
        %582 = vmatpush.msra.mxu0 0.0
        %583 = vmatpush.msra.mxu0 0.0
        %584 = vmatpush.msra.mxu0 0.0
        %585 = vmatpush.msra.mxu0 0.0
        %586 = vmatpush.msra.mxu0 0.0
        %587 = vmatpush.msra.mxu0 0.0
        %588 = vmatpush.msra.mxu0 0.0
        %589 = vmatpush.msra.mxu0 %v405
        %590 = vmatpush.msra.mxu0 %v186
        %591 = vmatpush.msra.mxu0 %v372
        %592 = vmatmul.f32.gmra.mxu0 %v410
        %v593 = vpop.f32.mrf.mxu0
        %v594 = vadd.f32 0.0, %v593
        %595 = vmatmul.f32.gmra.mxu0 %v413
        %v596 = vpop.f32.mrf.mxu0
        %v597 = vadd.f32 0.0, %v596
        %598 = vdwg.mxu0
        %599 = vst [vmem:[%s178] sm:$0xff] %v433
        %600 = vst [vmem:[%s178 + $0x8] sm:$0xff] %v456
        %601 = vst [vmem:[%s178 + $0x10] sm:$0xff] %v479
        %602 = vst [vmem:[%s178 + $0x18] sm:$0xff] %v502
        %603 = vst [vmem:[%s178 + $0x20] sm:$0xff] %v525
        %604 = vst [vmem:[%s178 + $0x28] sm:$0xff] %v548
        %605 = vst [vmem:[%s178 + $0x30] sm:$0xff] %v571
        %606 = vst [vmem:[%s178 + $0x38] sm:$0xff] %v594
        %607 = vst [vmem:[%s178 + $0x40] sm:$0xff] %v436
        %608 = vst [vmem:[%s178 + $0x48] sm:$0xff] %v459
        %609 = vst [vmem:[%s178 + $0x50] sm:$0xff] %v482
        %610 = vst [vmem:[%s178 + $0x58] sm:$0xff] %v505
        %611 = vst [vmem:[%s178 + $0x60] sm:$0xff] %v528
        %612 = vst [vmem:[%s178 + $0x68] sm:$0xff] %v551
        %613 = vst [vmem:[%s178 + $0x70] sm:$0xff] %v574
        %614 = vst [vmem:[%s178 + $0x78] sm:$0xff] %v597
        %s615 = sand.u32 %s75, 1
        %s616 = scalar_lea.sflag [#allocation4], %s615
        %s617 = sand.u32 %s75, 1
        %s618 = smul.addr %s617, 128
        %s619 = scalar_lea.vmem [#allocation7], %s618
        // Predicated region
        $region37: #{tpu_custom_call.1} parent=27 // pred_check
          %p620 = pneg %p85
        $region38: #{tpu_custom_call.1} parent=27 // pred_check_branch
          %622 = sbr.rel (%p620) target = $region40
        $region39: #{tpu_custom_call.1} parent=27 // pred_region
          %624 = vsyncadd %s616, 0
          %s625 = smul.addr %s20, 16
          %s626 = smul.addr %s625, 8
          %s627 = scalar_lea.hbm %s2, %s626
          %s628 = sshll.u32 %s619, 4
          %s629 = int_to_ptr.vmem [resolvable:$true] %s628
          %s630 = sshll.u32 %s627, 4
          %s631 = int_to_ptr.hbm [resolvable:$true] %s630
          %636 = dma.vmem_to_hbm [thread:$0]  %s629, 2048, %s631, %s616, 1024, 1024, 64
        $region40: #{tpu_custom_call.1} parent=27 // pred_fallthru
          _
      $region28: #{tpu_custom_call.1} parent=5 // pred_fallthru
        _
      %p637 = scmp.le.s32.totalorder 2, %s15
      // Predicated region
      $region41: #{tpu_custom_call.1} parent=5 // pred_check
        %p638 = pneg %p637
      $region42: #{tpu_custom_call.1} parent=5 // pred_check_branch
        %640 = sbr.rel (%p638) target = $region44
      $region43: #{tpu_custom_call.1} parent=5 // pred_region
        %s641 = ssub.s32 %s15, 2
        // Predicated region
        $region45: #{tpu_custom_call.1} parent=43 // pred_check
          %p642 = pneg %p91
        $region46: #{tpu_custom_call.1} parent=43 // pred_check_branch
          %644 = sbr.rel (%p642) target = $region48
        $region47: #{tpu_custom_call.1} parent=43 // pred_region
          %s645 = sand.u32 %s76, 1
          %s646 = scalar_lea.sflag [#allocation4], %s645
          %s647 = sand.u32 %s76, 1
          %s648 = smul.addr %s647, 128
          %s649 = scalar_lea.vmem [#allocation7], %s648
          %651 = dma.done %s646, 2048
        $region48: #{tpu_custom_call.1} parent=43 // pred_fallthru
          _
      $region44: #{tpu_custom_call.1} parent=5 // pred_fallthru
        _
    $region6: #{tpu_custom_call.1} parent=1 // loop_footer
      %s19 = sadd.s32 1, %s15
    $region7: #{tpu_custom_call.1} parent=1 // loop_footer_branch
      %14 = sbr.rel target = $region3
    $region8: #{tpu_custom_call.1} parent=1 // loop_exit
      _
    %652 = vsyncpa [#allocation3], 1
    %s653 = scalar_lea.sflag [#allocation3], 1
    %654 = vsyncpa %s653, 1
    %655 = vsyncpa [#allocation6], 1
    %656 = vsyncpa [#allocation4], 1
    %s657 = scalar_lea.sflag [#allocation4], 1
    %658 = vsyncpa %s657, 1

</llo_original>
